<compile_context>
chip_gen: v6e
topology: v6e:2x2x1
jax: 0.10.0
libtpu: 0.0.40
codegen_flags: <defaults>
</compile_context>

<pallas_src>
import functools

import jax
import jax.numpy as jnp
from jax.experimental import pallas as pl
from jax.experimental.pallas import tpu as pltpu

BN_EPS = 1e-5  # nn.BatchNorm1d default


def _round_up(a, b):
    return (a + b - 1) // b * b


@functools.partial(
    jax.jit,
    static_argnames=("stride", "padding", "tile_l", "matmul_dtype", "out_dtype",
                     "vmem_limit_bytes"))
def conv_bn_relu(x, weight, bias, gamma, beta, *, stride=1, padding=1,
                 tile_l=1024, matmul_dtype=jnp.bfloat16, out_dtype=jnp.float32,
                 vmem_limit_bytes=32 * 1024 * 1024):
    """ReLU(BatchNorm1d(Conv1d(x))) with train-mode batch statistics.

    x: (N, C_in, L) f32 (NCL), weight: (C_out, C_in, K), bias/gamma/beta: (C_out,)
    Returns (N, C_out, L_out) in `out_dtype`.
    """
    N, C_in, L = x.shape
    C_out, C_in_w, K = weight.shape
    assert C_in_w == C_in
    assert stride == 1, "only stride=1 (module default) is implemented"
    # TODO(synk): general stride would change the window indexing (l*stride - padding + k).
    L_out = L + 2 * padding - K + 1
    assert 1 <= K <= 129, "halo buffer is one 128-lane block wide"

    # ---- tiling ----
    T = min(_round_up(int(tile_l), 128), _round_up(L_out, 128))   # lane tile (x128)
    L_out_p = _round_up(L_out, T)
    n_tiles = L_out_p // T
    n_chunks = T // 128
    C_in_p = _round_up(C_in, 8)
    c8 = _round_up(C_out, 8)
    n_co = -(-c8 // 256)                         # <= 256 output channels per block
    TCO = _round_up(-(-c8 // n_co), 8)
    C_out_p = n_co * TCO
    KC = K * C_in_p
    x_len = L_out_p + 128                        # main tiles + one trailing halo block
    count = N * L_out                            # BN count over valid positions only
    needs_mask = (L_out != L_out_p)

    # ---- operand prep (one fused pad+cast copy of x; no im2col) ----
    xp = jnp.pad(x, ((0, 0), (0, C_in_p - C_in),
                     (padding, x_len - L - padding))).astype(matmul_dtype)
    # Thin halo: first 128 columns after each length tile (only K-1 of them used).
    halo = jnp.stack(
        [xp[:, :, (j + 1) * T:(j + 1) * T + 128] for j in range(n_tiles)], axis=1)
    # Fold K into the contraction: w_flat[o, k*C_in_p + c] = weight[o, c, k].
    w_flat = jnp.pad(jnp.transpose(weight, (0, 2, 1)),
                     ((0, C_out_p - C_out), (0, 0), (0, C_in_p - C_in))
                     ).reshape(C_out_p, KC).astype(matmul_dtype)
    del bias  # Conv bias cancels exactly under train-mode BN (y - batch_mean(y)).
    g_p = jnp.pad(gamma.astype(jnp.float32), (0, C_out_p - C_out),
                  constant_values=1.0)
    b_p = jnp.pad(beta.astype(jnp.float32), (0, C_out_p - C_out))

    # ---------------- pass 1: conv + BN partial sums (fully parallel grid) ----------
    def conv_stats_kernel(x_ref, h_ref, w_ref, y_ref, s_ref, q_ref):
        j = pl.program_id(2)
        # Main tile + thin 128-column halo (no full neighbour-tile re-read).
        xw = jnp.concatenate([x_ref[...], h_ref[...]], axis=1)          # (C_in_p, T+128)
        # Stack the K shifted windows along the contraction axis -> ONE deep matmul.
        stacked = jnp.concatenate([xw[:, k:k + T] for k in range(K)], axis=0)
        acc = jnp.dot(w_ref[...], stacked,
                      preferred_element_type=jnp.float32)               # (TCO, T) f32
        y_ref[...] = acc.astype(y_ref.dtype)

        # BN statistics: 128-lane partial sums via VPU adds (no MXU / XLU here);
        # the single 128->1 cross-lane reduce happens once in the JAX finalize.
        if needs_mask:
            col = jax.lax.broadcasted_iota(jnp.int32, (1, T), 1) + j * T
            ym = jnp.where(col < L_out, acc, 0.0)
        else:
            ym = acc
        ps = jnp.zeros((TCO, 128), jnp.float32)
        pq = jnp.zeros((TCO, 128), jnp.float32)
        for c in range(n_chunks):
            chunk = ym[:, c * 128:(c + 1) * 128]
            ps = ps + chunk
            pq = pq + chunk * chunk
        s_ref[...] = ps
        q_ref[...] = pq

    y_pre, psum, psq = pl.pallas_call(
        conv_stats_kernel,
        out_shape=(
            jax.ShapeDtypeStruct((N, C_out_p, L_out_p), matmul_dtype),     # pre-BN y
            jax.ShapeDtypeStruct((N, n_tiles, C_out_p, 128), jnp.float32),  # sum partials
            jax.ShapeDtypeStruct((N, n_tiles, C_out_p, 128), jnp.float32),  # sumsq partials
        ),
        grid=(n_co, N, n_tiles),   # C_out block outermost -> weights stay VMEM-resident
        in_specs=[
            pl.BlockSpec((None, C_in_p, T), lambda co, n, j: (n, 0, j)),
            pl.BlockSpec((None, None, C_in_p, 128), lambda co, n, j: (n, j, 0, 0)),
            pl.BlockSpec((TCO, KC), lambda co, n, j: (co, 0)),
        ],
        out_specs=(
            pl.BlockSpec((None, TCO, T), lambda co, n, j: (n, co, j)),
            pl.BlockSpec((None, None, TCO, 128), lambda co, n, j: (n, j, co, 0)),
            pl.BlockSpec((None, None, TCO, 128), lambda co, n, j: (n, j, co, 0)),
        ),
        compiler_params=pltpu.CompilerParams(
            # No cross-step carry anywhere -> safe to shard across v7x TensorCores.
            dimension_semantics=("parallel", "parallel", "parallel"),
            vmem_limit_bytes=vmem_limit_bytes,
        ),
    )(xp, halo, w_flat)
    # TODO(synk): for tiny-channel (memory-bound) layers a fused variant that
    # recomputes the conv in the apply pass instead of writing y would trade
    # MXU FLOPs for less HBM traffic.

    # ---------------- finalize (tiny, plain JAX): per-channel scale / shift ----------
    s_tot = jnp.sum(psum, axis=(0, 1, 3))                 # (C_out_p,)
    q_tot = jnp.sum(psq, axis=(0, 1, 3))
    mean = s_tot / count
    # TODO(synk): E[y^2]-E[y]^2 can cancel for extreme activation scales; a Welford
    # combine over the per-tile partials would be more robust at scale.
    var = jnp.maximum(q_tot / count - mean * mean, 0.0)   # biased var (train-mode BN)
    inv_std = jax.lax.rsqrt(var + BN_EPS)
    scale = (g_p * inv_std).reshape(C_out_p, 1)
    shift = (b_p - mean * g_p * inv_std).reshape(C_out_p, 1)
    # TODO(synk): PyTorch BatchNorm1d also updates running_mean/running_var as a
    # train-mode side effect; only the forward activation is produced here.

    # ---------------- pass 2: normalize + affine + ReLU (fully parallel) -------------
    def bn_relu_kernel(y_ref, scale_ref, shift_ref, o_ref):
        y = y_ref[...].astype(jnp.float32)
        o_ref[...] = jnp.maximum(y * scale_ref[...] + shift_ref[...],
                                 0.0).astype(o_ref.dtype)

    out_p = pl.pallas_call(
        bn_relu_kernel,
        out_shape=jax.ShapeDtypeStruct((N, C_out_p, L_out_p), out_dtype),
        grid=(n_co, N, n_tiles),
        in_specs=[
            pl.BlockSpec((None, TCO, T), lambda co, n, j: (n, co, j)),
            pl.BlockSpec((TCO, 1), lambda co, n, j: (co, 0)),
            pl.BlockSpec((TCO, 1), lambda co, n, j: (co, 0)),
        ],
        out_specs=pl.BlockSpec((None, TCO, T), lambda co, n, j: (n, co, j)),
        compiler_params=pltpu.CompilerParams(
            dimension_semantics=("parallel", "parallel", "parallel"),
            vmem_limit_bytes=vmem_limit_bytes,
        ),
    )(y_pre, scale, shift)

    # Strip channel / length padding; already NCL, so no transpose needed.
    return out_p[:, :C_out, :L_out]


def _reference(x, weight, bias, gamma, beta, padding=1):
    # Pure-JAX reference (Conv1d + train-mode BN + ReLU) for correctness checks.
    y = jax.lax.conv_general_dilated(
        x, weight, window_strides=(1,), padding=[(padding, padding)],
        dimension_numbers=("NCH", "OIH", "NCH"),
        precision=jax.lax.Precision.HIGHEST)
    y = y + bias[None, :, None]
    mean = jnp.mean(y, axis=(0, 2), keepdims=True)
    var = jnp.mean((y - mean) ** 2, axis=(0, 2), keepdims=True)  # biased variance
    y_hat = (y - mean) * jax.lax.rsqrt(var + BN_EPS)
    return jnp.maximum(y_hat * gamma[None, :, None] + beta[None, :, None], 0.0)


if __name__ == "__main__":
    key = jax.random.PRNGKey(0)
    k1, k2, k3, k4, k5 = jax.random.split(key, 5)

    N, C_in, C_out, L, K = 2, 4, 8, 16, 3

    x = jax.random.normal(k1, (N, C_in, L), dtype=jnp.float32)
    weight = jax.random.normal(k2, (C_out, C_in, K), dtype=jnp.float32) * 0.1
    bias = jax.random.normal(k3, (C_out,), dtype=jnp.float32) * 0.1
    gamma = 1.0 + 0.1 * jax.random.normal(k4, (C_out,), dtype=jnp.float32)
    beta = 0.1 * jax.random.normal(k5, (C_out,), dtype=jnp.float32)

    ref = _reference(x, weight, bias, gamma, beta, padding=1)

    # Exactness check: f32 MXU operands, f32 intermediate activation.
    out_f32 = conv_bn_relu(x, weight, bias, gamma, beta, matmul_dtype=jnp.float32)
    jax.block_until_ready(out_f32)
    assert out_f32.shape == (N, C_out, L), out_f32.shape
    err32 = float(jnp.max(jnp.abs(out_f32 - ref)))
    assert err32 < 2e-4, f"f32 path mismatch: {err32}"

    # Default fast path: bf16 MXU operands / bf16 intermediate, f32 stats & output.
    out_bf16 = conv_bn_relu(x, weight, bias, gamma, beta, matmul_dtype=jnp.bfloat16)
    jax.block_until_ready(out_bf16)
    assert out_bf16.shape == (N, C_out, L), out_bf16.shape
    errbf = float(jnp.max(jnp.abs(out_bf16 - ref)))
    assert errbf < 8e-2, f"bf16 path mismatch: {errbf}"

    print("KERNEL_OK")
</pallas_src>

<mosaic_0001>
module attributes {stable_mosaic.version = 11 : i64} {
  func.func @conv_stats_kernel(%arg0: i32, %arg1: i32, %arg2: i32, %arg3: memref<1x8x128xf32, #tpu.memory_space<vmem>>, %arg4: memref<1x1x8x128xf32, #tpu.memory_space<vmem>>, %arg5: memref<8x24xf32, #tpu.memory_space<vmem>>, %arg6: memref<1x8x128xf32, #tpu.memory_space<vmem>>, %arg7: memref<1x1x8x128xf32, #tpu.memory_space<vmem>>, %arg8: memref<1x1x8x128xf32, #tpu.memory_space<vmem>>) attributes {dimension_semantics = [#tpu.dimension_semantics<parallel>, #tpu.dimension_semantics<parallel>, #tpu.dimension_semantics<parallel>], iteration_bounds = array<i64: 1, 2, 1>, scalar_prefetch = 0 : i64, scratch_operands = 0 : i64, tpu.core_type = #tpu.core_type<tc>, window_params = [{transform_indices = @transform_0, window_bounds = array<i64: 1, 8, 128>}, {transform_indices = @transform_1, window_bounds = array<i64: 1, 1, 8, 128>}, {transform_indices = @transform_2, window_bounds = array<i64: 8, 24>}, {transform_indices = @transform_3, window_bounds = array<i64: 1, 8, 128>}, {transform_indices = @transform_4, window_bounds = array<i64: 1, 1, 8, 128>}, {transform_indices = @transform_5, window_bounds = array<i64: 1, 1, 8, 128>}]} {
    %c0 = arith.constant 0 : index
    %c0_0 = arith.constant 0 : index
    %c0_1 = arith.constant 0 : index
    %0 = vector.load %arg3[%c0, %c0_0, %c0_1] : memref<1x8x128xf32, #tpu.memory_space<vmem>>, vector<1x8x128xf32>
    %1 = vector.shape_cast %0 : vector<1x8x128xf32> to vector<8x128xf32>
    %c0_2 = arith.constant 0 : index
    %c0_3 = arith.constant 0 : index
    %c0_4 = arith.constant 0 : index
    %c0_5 = arith.constant 0 : index
    %2 = vector.load %arg4[%c0_2, %c0_3, %c0_4, %c0_5] : memref<1x1x8x128xf32, #tpu.memory_space<vmem>>, vector<1x1x8x128xf32>
    %3 = vector.shape_cast %2 : vector<1x1x8x128xf32> to vector<8x128xf32>
    %4 = tpu.concatenate %1, %3 in 1 : vector<8x128xf32>, vector<8x128xf32> -> vector<8x256xf32>
    %5 = vector.extract_strided_slice %4 {offsets = [0, 0], sizes = [8, 128], strides = [1, 1]} : vector<8x256xf32> to vector<8x128xf32>
    %6 = vector.extract_strided_slice %4 {offsets = [0, 1], sizes = [8, 128], strides = [1, 1]} : vector<8x256xf32> to vector<8x128xf32>
    %7 = vector.extract_strided_slice %4 {offsets = [0, 2], sizes = [8, 128], strides = [1, 1]} : vector<8x256xf32> to vector<8x128xf32>
    %8 = tpu.concatenate %5, %6, %7 in 0 : vector<8x128xf32>, vector<8x128xf32>, vector<8x128xf32> -> vector<24x128xf32>
    %c0_6 = arith.constant 0 : index
    %c0_7 = arith.constant 0 : index
    %9 = vector.load %arg5[%c0_6, %c0_7] : memref<8x24xf32, #tpu.memory_space<vmem>>, vector<8x24xf32>
    %cst = arith.constant dense<0.000000e+00> : vector<8x128xf32>
    %10 = tpu.matmul %9, %8, %cst {dimension_numbers = #tpu.dot_dimension_numbers<[1], [0], [0], [1], [0, 0, 1, 1], [], []>} : vector<8x24xf32>, vector<24x128xf32>, vector<8x128xf32> -> vector<8x128xf32>
    %c0_8 = arith.constant 0 : index
    %c0_9 = arith.constant 0 : index
    %c0_10 = arith.constant 0 : index
    %11 = vector.load %arg6[%c0_8, %c0_9, %c0_10] : memref<1x8x128xf32, #tpu.memory_space<vmem>>, vector<1x8x128xf32>
    %12 = vector.shape_cast %11 : vector<1x8x128xf32> to vector<8x128xf32>
    %13 = vector.shape_cast %10 : vector<8x128xf32> to vector<1x8x128xf32>
    tpu.vector_store %arg6[%c0_8, %c0_9, %c0_10], %13 {strides = array<i32>} : memref<1x8x128xf32, #tpu.memory_space<vmem>>, vector<1x8x128xf32>,
    %14 = tpu.iota {dimensions = array<i32: 1>} : vector<1x128xi32>
    %c128_i32 = arith.constant 128 : i32
    %15 = arith.muli %arg2, %c128_i32 : i32
    %16 = vector.broadcast %15 : i32 to vector<1x128xi32>
    %17 = arith.addi %14, %16 : vector<1x128xi32>
    %c16_i32 = arith.constant 16 : i32
    %18 = vector.broadcast %c16_i32 : i32 to vector<1x128xi32>
    %19 = arith.cmpi slt, %17, %18 : vector<1x128xi32>
    %cst_11 = arith.constant 0.000000e+00 : f32
    %20 = vector.shape_cast %19 : vector<1x128xi1> to vector<1x128xi1>
    %21 = vector.broadcast %20 : vector<1x128xi1> to vector<8x128xi1>
    %22 = vector.broadcast %cst_11 : f32 to vector<8x128xf32>
    %23 = arith.select %21, %10, %22 : vector<8x128xi1>, vector<8x128xf32>
    %cst_12 = arith.constant 0.000000e+00 : f32
    %24 = vector.broadcast %cst_12 : f32 to vector<8x128xf32>
    %cst_13 = arith.constant 0.000000e+00 : f32
    %25 = vector.broadcast %cst_13 : f32 to vector<8x128xf32>
    %26 = arith.addf %24, %23 : vector<8x128xf32>
    %27 = arith.mulf %23, %23 : vector<8x128xf32>
    %28 = arith.addf %25, %27 : vector<8x128xf32>
    %c0_14 = arith.constant 0 : index
    %c0_15 = arith.constant 0 : index
    %c0_16 = arith.constant 0 : index
    %c0_17 = arith.constant 0 : index
    %29 = vector.load %arg7[%c0_14, %c0_15, %c0_16, %c0_17] : memref<1x1x8x128xf32, #tpu.memory_space<vmem>>, vector<1x1x8x128xf32>
    %30 = vector.shape_cast %29 : vector<1x1x8x128xf32> to vector<8x128xf32>
    %31 = vector.shape_cast %26 : vector<8x128xf32> to vector<1x1x8x128xf32>
    tpu.vector_store %arg7[%c0_14, %c0_15, %c0_16, %c0_17], %31 {strides = array<i32>} : memref<1x1x8x128xf32, #tpu.memory_space<vmem>>, vector<1x1x8x128xf32>,
    %c0_18 = arith.constant 0 : index
    %c0_19 = arith.constant 0 : index
    %c0_20 = arith.constant 0 : index
    %c0_21 = arith.constant 0 : index
    %32 = vector.load %arg8[%c0_18, %c0_19, %c0_20, %c0_21] : memref<1x1x8x128xf32, #tpu.memory_space<vmem>>, vector<1x1x8x128xf32>
    %33 = vector.shape_cast %32 : vector<1x1x8x128xf32> to vector<8x128xf32>
    %34 = vector.shape_cast %28 : vector<8x128xf32> to vector<1x1x8x128xf32>
    tpu.vector_store %arg8[%c0_18, %c0_19, %c0_20, %c0_21], %34 {strides = array<i32>} : memref<1x1x8x128xf32, #tpu.memory_space<vmem>>, vector<1x1x8x128xf32>,
    return
  }
  func.func @transform_0(%arg0: i32, %arg1: i32, %arg2: i32) -> (i32, i32, i32) {
    %c0_i32 = arith.constant 0 : i32
    %c0_i32_0 = arith.constant 0 : i32
    return %arg1, %c0_i32, %arg2 : i32, i32, i32
  }
  func.func @transform_1(%arg0: i32, %arg1: i32, %arg2: i32) -> (i32, i32, i32, i32) {
    %c0_i32 = arith.constant 0 : i32
    %c0_i32_0 = arith.constant 0 : i32
    %c0_i32_1 = arith.constant 0 : i32
    return %arg1, %arg2, %c0_i32, %c0_i32_0 : i32, i32, i32, i32
  }
  func.func @transform_2(%arg0: i32, %arg1: i32, %arg2: i32) -> (i32, i32) {
    %c0_i32 = arith.constant 0 : i32
    %c0_i32_0 = arith.constant 0 : i32
    return %arg0, %c0_i32 : i32, i32
  }
  func.func @transform_3(%arg0: i32, %arg1: i32, %arg2: i32) -> (i32, i32, i32) {
    %c0_i32 = arith.constant 0 : i32
    return %arg1, %arg0, %arg2 : i32, i32, i32
  }
  func.func @transform_4(%arg0: i32, %arg1: i32, %arg2: i32) -> (i32, i32, i32, i32) {
    %c0_i32 = arith.constant 0 : i32
    %c0_i32_0 = arith.constant 0 : i32
    return %arg1, %arg2, %arg0, %c0_i32 : i32, i32, i32, i32
  }
  func.func @transform_5(%arg0: i32, %arg1: i32, %arg2: i32) -> (i32, i32, i32, i32) {
    %c0_i32 = arith.constant 0 : i32
    %c0_i32_0 = arith.constant 0 : i32
    return %arg1, %arg2, %arg0, %c0_i32 : i32, i32, i32, i32
  }
}

module attributes {stable_mosaic.version = 11 : i64} {
  func.func @bn_relu_kernel(%arg0: i32, %arg1: i32, %arg2: i32, %arg3: memref<1x8x128xf32, #tpu.memory_space<vmem>>, %arg4: memref<8x1xf32, #tpu.memory_space<vmem>>, %arg5: memref<8x1xf32, #tpu.memory_space<vmem>>, %arg6: memref<1x8x128xf32, #tpu.memory_space<vmem>>) attributes {dimension_semantics = [#tpu.dimension_semantics<parallel>, #tpu.dimension_semantics<parallel>, #tpu.dimension_semantics<parallel>], iteration_bounds = array<i64: 1, 2, 1>, scalar_prefetch = 0 : i64, scratch_operands = 0 : i64, tpu.core_type = #tpu.core_type<tc>, window_params = [{transform_indices = @transform_0, window_bounds = array<i64: 1, 8, 128>}, {transform_indices = @transform_1, window_bounds = array<i64: 8, 1>}, {transform_indices = @transform_2, window_bounds = array<i64: 8, 1>}, {transform_indices = @transform_3, window_bounds = array<i64: 1, 8, 128>}]} {
    %c0 = arith.constant 0 : index
    %c0_0 = arith.constant 0 : index
    %c0_1 = arith.constant 0 : index
    %0 = vector.load %arg3[%c0, %c0_0, %c0_1] : memref<1x8x128xf32, #tpu.memory_space<vmem>>, vector<1x8x128xf32>
    %1 = vector.shape_cast %0 : vector<1x8x128xf32> to vector<8x128xf32>
    %c0_2 = arith.constant 0 : index
    %c0_3 = arith.constant 0 : index
    %2 = vector.load %arg4[%c0_2, %c0_3] : memref<8x1xf32, #tpu.memory_space<vmem>>, vector<8x1xf32>
    %3 = vector.broadcast %2 : vector<8x1xf32> to vector<8x128xf32>
    %4 = arith.mulf %1, %3 : vector<8x128xf32>
    %c0_4 = arith.constant 0 : index
    %c0_5 = arith.constant 0 : index
    %5 = vector.load %arg5[%c0_4, %c0_5] : memref<8x1xf32, #tpu.memory_space<vmem>>, vector<8x1xf32>
    %6 = vector.broadcast %5 : vector<8x1xf32> to vector<8x128xf32>
    %7 = arith.addf %4, %6 : vector<8x128xf32>
    %cst = arith.constant 0.000000e+00 : f32
    %8 = vector.broadcast %cst : f32 to vector<8x128xf32>
    %9 = arith.maximumf %7, %8 : vector<8x128xf32>
    %c0_6 = arith.constant 0 : index
    %c0_7 = arith.constant 0 : index
    %c0_8 = arith.constant 0 : index
    %10 = vector.load %arg6[%c0_6, %c0_7, %c0_8] : memref<1x8x128xf32, #tpu.memory_space<vmem>>, vector<1x8x128xf32>
    %11 = vector.shape_cast %10 : vector<1x8x128xf32> to vector<8x128xf32>
    %12 = vector.shape_cast %9 : vector<8x128xf32> to vector<1x8x128xf32>
    tpu.vector_store %arg6[%c0_6, %c0_7, %c0_8], %12 {strides = array<i32>} : memref<1x8x128xf32, #tpu.memory_space<vmem>>, vector<1x8x128xf32>,
    return
  }
  func.func @transform_0(%arg0: i32, %arg1: i32, %arg2: i32) -> (i32, i32, i32) {
    %c0_i32 = arith.constant 0 : i32
    return %arg1, %arg0, %arg2 : i32, i32, i32
  }
  func.func @transform_1(%arg0: i32, %arg1: i32, %arg2: i32) -> (i32, i32) {
    %c0_i32 = arith.constant 0 : i32
    %c0_i32_0 = arith.constant 0 : i32
    return %arg0, %c0_i32 : i32, i32
  }
  func.func @transform_2(%arg0: i32, %arg1: i32, %arg2: i32) -> (i32, i32) {
    %c0_i32 = arith.constant 0 : i32
    %c0_i32_0 = arith.constant 0 : i32
    return %arg0, %c0_i32 : i32, i32
  }
  func.func @transform_3(%arg0: i32, %arg1: i32, %arg2: i32) -> (i32, i32, i32) {
    %c0_i32 = arith.constant 0 : i32
    return %arg1, %arg0, %arg2 : i32, i32, i32
  }
}

</mosaic_0001>

<llo_original>
// kernel: conv_bn_relu.3
$region0: #{conv_bn_relu.3}
  #allocation0 [shape = 'u32[]', space=smem, size = 0x4, offset = 0x4, fixed_abs, tag = 'smem constant byte address 0x4 - core index']
  #allocation1 [shape = 'u32[144,128]{1,0:T(1,128)}', space=vmem, size = 0x12000, scoped, tag = 'internal scratch']
  %s0 = inlined_call_operand.vmem [shape: f32[2,8,128], index: 0, kind: input, shape index: {}]
  %s1 = inlined_call_operand.vmem [shape: f32[8,1], index: 1, kind: input, shape index: {}]
  %s2 = inlined_call_operand.vmem [shape: f32[8,1], index: 2, kind: input, shape index: {}]
  %s3 = inlined_call_operand.hbm [shape: f32[2,8,128], index: 3, kind: output, shape index: {}]
  %s4 = sld [smem:[#allocation0]]
  $region45: #{conv_bn_relu.3} parent=0
    _
  %s6 = ssub.s32 1, %s4
  %s7 = scalar_select 0, %s6, %s4
  $region1: #{conv_bn_relu.3} parent=0
    #allocation2 [shape = 'u8[8192]{0}', space=vmem, size = 0x2000, scoped, tag = 'output window, operand 0']
    #allocation3 [shape = 's32[2]{0}', space=sflag, size = 0x8, scoped, tag = 'scoped memory for conv_bn_relu.3']
    %8 = vsyncpa [#allocation3], 0
    %s9 = scalar_lea.sflag [#allocation3], 1
    %10 = vsyncpa %s9, 0
    loop: start=0, step=1, limit=4
    $region2: #{conv_bn_relu.3} parent=1 // loop_pre_header
      _
    $region3: #{conv_bn_relu.3} parent=1 // loop_header
      %s12 = sphi 0, %s16
      %p13 = scmp.ge.s32.totalorder %s12, 4
      %s19 = sphi 0, %s38
      %s20 = sphi 0, %s34
      %s21 = sphi 0, %s30
      %s22 = sphi 0, %s19
      %s23 = sphi 0, %s20
      %s24 = sphi 0, %s21
      %s25 = sphi 0, %s22
      %s26 = sphi 0, %s23
      %s27 = sphi 0, %s24
      %s45 = sphi 0, %s47
      %s48 = sphi 0, %s45
      %s49 = sphi 0, %s48
      %s65 = sphi 0, %s49
      %s71 = sphi 0, %s73
      %s74 = sphi 0, %s71
      %s75 = sphi 0, %s74
      %s91 = sphi 0, %s75
      %s97 = sphi 0, %s99
      %s100 = sphi 0, %s97
      %s101 = sphi 0, %s100
      %s117 = sphi 0, %s101
      %s127 = sphi 0, %s129
      %s130 = sphi 0, %s127
      %s131 = sphi 0, %s130
      %s147 = sphi 0, %s131
    $region4: #{conv_bn_relu.3} parent=1 // loop_header_branch
      %15 = sbr.rel (%p13) target = $region8
    $region5: #{conv_bn_relu.3} parent=1 // loop_body
      %s17 = ssub.s32 %s12, 1
      %s18 = ssub.s32 %s12, 2
      %s28 = sadd.s32 1, %s21
      %p29 = scmp.ge.s32.totalorder %s28, 1
      %s30 = scalar_select %p29, 0, %s28
      %s31 = sadd.s32 1, %s20
      %s32 = scalar_select %p29, %s31, %s20
      %p33 = scmp.ge.s32.totalorder %s32, 2
      %s34 = scalar_select %p33, 0, %s32
      %s35 = sadd.s32 1, %s19
      %s36 = scalar_select %p33, %s35, %s19
      %p37 = scmp.ge.s32.totalorder %s36, 1
      %s38 = scalar_select %p37, 0, %s36
      %s39 = ssub.s32 %s20, %s34
      %s40 = ssub.s32 %s19, %s38
      %s41 = sor.u32 %s39, %s40
      %s42 = ssub.s32 %s21, %s30
      %s43 = sor.u32 %s41, %s42
      %p44 = scmp.eq.s32.totalorder %s43, 0
      %s46 = sadd.s32 %s45, 1
      %s47 = scalar_select %p44, %s45, %s46
      %p50 = pneg %p44
      %p51 = scmp.eq.s32.totalorder %s12, 1
      %p52 = por %p50, %p51
      %p53 = scmp.ne.s32.totalorder %s45, %s48
      %p54 = scmp.eq.s32.totalorder %s12, 0
      %p55 = por %p53, %p54
      %p56 = scmp.ne.s32.totalorder %s45, %s48
      %p57 = scmp.eq.s32.totalorder %s17, 1
      %p58 = por %p56, %p57
      %p59 = scmp.ne.s32.totalorder %s48, %s49
      %p60 = scmp.eq.s32.totalorder %s17, 0
      %p61 = por %p59, %p60
      %p62 = scmp.ne.s32.totalorder %s48, %s49
      %p63 = scmp.eq.s32.totalorder %s18, 1
      %p64 = por %p62, %p63
      %p66 = scmp.ne.s32.totalorder %s49, %s65
      %p67 = scmp.eq.s32.totalorder %s18, 0
      %p68 = por %p66, %p67
      %s69 = ssub.s32 %s19, %s38
      %p70 = scmp.eq.s32.totalorder %s69, 0
      %s72 = sadd.s32 %s71, 1
      %s73 = scalar_select %p70, %s71, %s72
      %p76 = pneg %p70
      %p77 = scmp.eq.s32.totalorder %s12, 1
      %p78 = por %p76, %p77
      %p79 = scmp.ne.s32.totalorder %s71, %s74
      %p80 = scmp.eq.s32.totalorder %s12, 0
      %p81 = por %p79, %p80
      %p82 = scmp.ne.s32.totalorder %s71, %s74
      %p83 = scmp.eq.s32.totalorder %s17, 1
      %p84 = por %p82, %p83
      %p85 = scmp.ne.s32.totalorder %s74, %s75
      %p86 = scmp.eq.s32.totalorder %s17, 0
      %p87 = por %p85, %p86
      %p88 = scmp.ne.s32.totalorder %s74, %s75
      %p89 = scmp.eq.s32.totalorder %s18, 1
      %p90 = por %p88, %p89
      %p92 = scmp.ne.s32.totalorder %s75, %s91
      %p93 = scmp.eq.s32.totalorder %s18, 0
      %p94 = por %p92, %p93
      %s95 = ssub.s32 %s19, %s38
      %p96 = scmp.eq.s32.totalorder %s95, 0
      %s98 = sadd.s32 %s97, 1
      %s99 = scalar_select %p96, %s97, %s98
      %p102 = pneg %p96
      %p103 = scmp.eq.s32.totalorder %s12, 1
      %p104 = por %p102, %p103
      %p105 = scmp.ne.s32.totalorder %s97, %s100
      %p106 = scmp.eq.s32.totalorder %s12, 0
      %p107 = por %p105, %p106
      %p108 = scmp.ne.s32.totalorder %s97, %s100
      %p109 = scmp.eq.s32.totalorder %s17, 1
      %p110 = por %p108, %p109
      %p111 = scmp.ne.s32.totalorder %s100, %s101
      %p112 = scmp.eq.s32.totalorder %s17, 0
      %p113 = por %p111, %p112
      %p114 = scmp.ne.s32.totalorder %s100, %s101
      %p115 = scmp.eq.s32.totalorder %s18, 1
      %p116 = por %p114, %p115
      %p118 = scmp.ne.s32.totalorder %s101, %s117
      %p119 = scmp.eq.s32.totalorder %s18, 0
      %p120 = por %p118, %p119
      %s121 = ssub.s32 %s20, %s34
      %s122 = ssub.s32 %s19, %s38
      %s123 = sor.u32 %s121, %s122
      %s124 = ssub.s32 %s21, %s30
      %s125 = sor.u32 %s123, %s124
      %p126 = scmp.eq.s32.totalorder %s125, 0
      %s128 = sadd.s32 %s127, 1
      %s129 = scalar_select %p126, %s127, %s128
      %p132 = pneg %p126
      %p133 = scmp.eq.s32.totalorder %s12, 1
      %p134 = por %p132, %p133
      %p135 = scmp.ne.s32.totalorder %s127, %s130
      %p136 = scmp.eq.s32.totalorder %s12, 0
      %p137 = por %p135, %p136
      %p138 = scmp.ne.s32.totalorder %s127, %s130
      %p139 = scmp.eq.s32.totalorder %s17, 1
      %p140 = por %p138, %p139
      %p141 = scmp.ne.s32.totalorder %s130, %s131
      %p142 = scmp.eq.s32.totalorder %s17, 0
      %p143 = por %p141, %p142
      %p144 = scmp.ne.s32.totalorder %s130, %s131
      %p145 = scmp.eq.s32.totalorder %s18, 1
      %p146 = por %p144, %p145
      %p148 = scmp.ne.s32.totalorder %s131, %s147
      %p149 = scmp.eq.s32.totalorder %s18, 0
      %p150 = por %p148, %p149
      %p151 = scmp.le.s32.totalorder 1, %s12
      %p152 = scmp.lt.s32.totalorder %s12, 3
      %p153 = pnand %p151, %p152
      %p154 = pneg %p153
      // Predicated region
      $region9: #{conv_bn_relu.3} parent=5 // pred_check
        _
      $region10: #{conv_bn_relu.3} parent=5 // pred_check_branch
        %156 = sbr.rel (%p153) target = $region12
      $region11: #{conv_bn_relu.3} parent=5 // pred_region
        %s157 = ssub.s32 %s12, 1
        // Predicated region
        $region13: #{conv_bn_relu.3} parent=11 // pred_check
          %p158 = pneg %p87
        $region14: #{conv_bn_relu.3} parent=11 // pred_check_branch
          %160 = sbr.rel (%p158) target = $region16
        $region15: #{conv_bn_relu.3} parent=11 // pred_region
          %p161 = scmp.lt.s32.totalorder %s22, 0
          %s162 = scalar_select %p161, %s22, 0
          %s163 = smul.addr %s162, 8
          %s164 = scalar_lea.vmem %s1, %s163
        $region16: #{conv_bn_relu.3} parent=11 // pred_fallthru
          _
        // Predicated region
        $region17: #{conv_bn_relu.3} parent=11 // pred_check
          %p165 = pneg %p113
        $region18: #{conv_bn_relu.3} parent=11 // pred_check_branch
          %167 = sbr.rel (%p165) target = $region20
        $region19: #{conv_bn_relu.3} parent=11 // pred_region
          %p168 = scmp.lt.s32.totalorder %s22, 0
          %s169 = scalar_select %p168, %s22, 0
          %s170 = smul.addr %s169, 8
          %s171 = scalar_lea.vmem %s2, %s170
        $region20: #{conv_bn_relu.3} parent=11 // pred_fallthru
          _
      $region12: #{conv_bn_relu.3} parent=5 // pred_fallthru
        _
      %p172 = scmp.lt.s32.totalorder %s12, 2
      // Predicated region
      $region21: #{conv_bn_relu.3} parent=5 // pred_check
        %p173 = pneg %p172
      $region22: #{conv_bn_relu.3} parent=5 // pred_check_branch
        %175 = sbr.rel (%p173) target = $region24
      $region23: #{conv_bn_relu.3} parent=5 // pred_region
        // Predicated region
        $region25: #{conv_bn_relu.3} parent=23 // pred_check
          %p176 = pneg %p55
        $region26: #{conv_bn_relu.3} parent=23 // pred_check_branch
          %178 = sbr.rel (%p176) target = $region28
        $region27: #{conv_bn_relu.3} parent=23 // pred_region
          %p179 = scmp.lt.s32.totalorder %s20, 1
          %s180 = scalar_select %p179, %s20, 1
          %p181 = scmp.lt.s32.totalorder %s19, 0
          %s182 = scalar_select %p181, %s19, 0
          %p183 = scmp.lt.s32.totalorder %s21, 0
          %s184 = scalar_select %p183, %s21, 0
          %s185 = sadd.s32 %s184, %s182
          %s186 = sadd.s32 %s185, %s180
          %s187 = smul.addr %s186, 8
          %s188 = scalar_lea.vmem %s0, %s187
        $region28: #{conv_bn_relu.3} parent=23 // pred_fallthru
          _
      $region24: #{conv_bn_relu.3} parent=5 // pred_fallthru
        _
      %p189 = scmp.le.s32.totalorder 1, %s12
      %p190 = scmp.lt.s32.totalorder %s12, 3
      %p191 = pnand %p189, %p190
      %p192 = pneg %p191
      // Predicated region
      $region29: #{conv_bn_relu.3} parent=5 // pred_check
        _
      $region30: #{conv_bn_relu.3} parent=5 // pred_check_branch
        %194 = sbr.rel (%p191) target = $region32
      $region31: #{conv_bn_relu.3} parent=5 // pred_region
        %s195 = ssub.s32 %s12, 1
        %p196 = scmp.lt.s32.totalorder %s23, 1
        %s197 = scalar_select %p196, %s23, 1
        %p198 = scmp.lt.s32.totalorder %s22, 0
        %s199 = scalar_select %p198, %s22, 0
        %p200 = scmp.lt.s32.totalorder %s24, 0
        %s201 = scalar_select %p200, %s24, 0
        %s202 = sadd.s32 %s201, %s199
        %s203 = sadd.s32 %s202, %s197
        %s204 = smul.addr %s203, 8
        %s205 = scalar_lea.vmem %s0, %s204
        %p206 = pneg %p61
        %p207 = pneg %p58
        %p208 = scmp.lt.s32.totalorder %s22, 0
        %s209 = scalar_select %p208, %s22, 0
        %s210 = smul.addr %s209, 8
        %s211 = scalar_lea.vmem %s1, %s210
        %p212 = pneg %p87
        %p213 = pneg %p84
        %p214 = scmp.lt.s32.totalorder %s22, 0
        %s215 = scalar_select %p214, %s22, 0
        %s216 = smul.addr %s215, 8
        %s217 = scalar_lea.vmem %s2, %s216
        %p218 = pneg %p113
        %p219 = pneg %p110
        %p220 = pneg %p143
        %p221 = pneg %p140
        %s222 = sand.u32 %s130, 1
        %s223 = scalar_lea.sflag [#allocation3], %s222
        %s224 = sand.u32 %s130, 1
        %s225 = smul.addr %s224, 8
        %s226 = scalar_lea.vmem [#allocation2], %s225
        %p227 = scmp.lt.s32.totalorder %s23, 1
        %s228 = scalar_select %p227, %s23, 1
        %p229 = scmp.lt.s32.totalorder %s22, 0
        %s230 = scalar_select %p229, %s22, 0
        %p231 = scmp.lt.s32.totalorder %s24, 0
        %s232 = scalar_select %p231, %s24, 0
        %s233 = sadd.s32 %s232, %s230
        %s234 = sadd.s32 %s233, %s228
        %s235 = smul.addr %s234, 8
        %s236 = scalar_lea.vmem %s0, %s235
        %p237 = scmp.lt.s32.totalorder %s22, 0
        %s238 = scalar_select %p237, %s22, 0
        %s239 = smul.addr %s238, 8
        %s240 = scalar_lea.vmem %s1, %s239
        %p241 = scmp.lt.s32.totalorder %s22, 0
        %s242 = scalar_select %p241, %s22, 0
        %s243 = smul.addr %s242, 8
        %s244 = scalar_lea.vmem %s2, %s243
        %v245 = vld [vmem:[%s236] sm:$0xff]
        %v246 = vld [vmem:[%s240] sm:$0xff]
        %248 = vset.pattern.permute.xlu0 0
        %249 = vperm.xlu0 %248, %v246
        %v250 = vpop.permute.xlu0 %249
        %v252 = vmul.f32 %v245, %v250
        %v253 = vld [vmem:[%s244] sm:$0xff]
        %255 = vset.pattern.permute.xlu0 0
        %256 = vperm.xlu0 %255, %v253
        %v257 = vpop.permute.xlu0 %256
        %v259 = vadd.f32 %v252, %v257
        %v260 = vmax.f32 %v259, 0.0
        %261 = vst [vmem:[%s226] sm:$0xff] %v260
        %s262 = sand.u32 %s130, 1
        %s263 = scalar_lea.sflag [#allocation3], %s262
        %s264 = sand.u32 %s130, 1
        %s265 = smul.addr %s264, 8
        %s266 = scalar_lea.vmem [#allocation2], %s265
        // Predicated region
        $region33: #{conv_bn_relu.3} parent=31 // pred_check
          %p267 = pneg %p140
        $region34: #{conv_bn_relu.3} parent=31 // pred_check_branch
          %269 = sbr.rel (%p267) target = $region36
        $region35: #{conv_bn_relu.3} parent=31 // pred_region
          %s271 = ssub.s32 128, 128
          %272 = vsyncadd %s263, %s271
          %s273 = sadd.s32 %s24, %s22
          %s274 = sadd.s32 %s273, %s23
          %s275 = smul.addr %s274, 128
          %s276 = scalar_lea.hbm %s3, %s275
          %s278 = sshll.u32 %s266, 4
          %s279 = int_to_ptr.vmem [resolvable:$true] %s278
          %281 = dma.vmem_to_hbm [thread:$0]  %s279, 128, %s276, %s263
        $region36: #{conv_bn_relu.3} parent=31 // pred_fallthru
          _
      $region32: #{conv_bn_relu.3} parent=5 // pred_fallthru
        _
      %p282 = scmp.le.s32.totalorder 2, %s12
      // Predicated region
      $region37: #{conv_bn_relu.3} parent=5 // pred_check
        %p283 = pneg %p282
      $region38: #{conv_bn_relu.3} parent=5 // pred_check_branch
        %285 = sbr.rel (%p283) target = $region40
      $region39: #{conv_bn_relu.3} parent=5 // pred_region
        %s286 = ssub.s32 %s12, 2
        // Predicated region
        $region41: #{conv_bn_relu.3} parent=39 // pred_check
          %p287 = pneg %p146
        $region42: #{conv_bn_relu.3} parent=39 // pred_check_branch
          %289 = sbr.rel (%p287) target = $region44
        $region43: #{conv_bn_relu.3} parent=39 // pred_region
          %s290 = sand.u32 %s131, 1
          %s291 = scalar_lea.sflag [#allocation3], %s290
          %s292 = sand.u32 %s131, 1
          %s293 = smul.addr %s292, 8
          %s294 = scalar_lea.vmem [#allocation2], %s293
          %295 = dma.done %s291, 128
        $region44: #{conv_bn_relu.3} parent=39 // pred_fallthru
          _
      $region40: #{conv_bn_relu.3} parent=5 // pred_fallthru
        _
    $region6: #{conv_bn_relu.3} parent=1 // loop_footer
      %s16 = sadd.s32 1, %s12
    $region7: #{conv_bn_relu.3} parent=1 // loop_footer_branch
      %11 = sbr.rel target = $region3
    $region8: #{conv_bn_relu.3} parent=1 // loop_exit
      _
    %296 = vsyncpa [#allocation3], 1
    %s297 = scalar_lea.sflag [#allocation3], 1
    %298 = vsyncpa %s297, 1

// kernel: conv_bn_relu.2
$region0: #{conv_bn_relu.2}
  #allocation0 [shape = 'u32[]', space=smem, size = 0x4, offset = 0x4, fixed_abs, tag = 'smem constant byte address 0x4 - core index']
  #allocation1 [shape = 'u32[144,128]{1,0:T(1,128)}', space=vmem, size = 0x12000, scoped, tag = 'internal scratch']
  %s0 = inlined_call_operand.vmem [shape: f32[2,8,256], index: 0, kind: input, shape index: {}]
  %s1 = inlined_call_operand.vmem [shape: f32[2,1,8,128], index: 1, kind: input, shape index: {}]
  %s2 = inlined_call_operand.vmem [shape: f32[8,24], index: 2, kind: input, shape index: {}]
  %s3 = inlined_call_operand.vmem [shape: f32[2,8,128], index: 3, kind: output, shape index: {0}]
  %s4 = inlined_call_operand.vmem [shape: f32[2,1,8,128], index: 4, kind: output, shape index: {1}]
  %s5 = inlined_call_operand.vmem [shape: f32[2,1,8,128], index: 5, kind: output, shape index: {2}]
  %6 = xla_tuple %s3, %s4, %s5
  %s7 = sld [smem:[#allocation0]]
  $region61: #{conv_bn_relu.2} parent=0
    _
  %s9 = ssub.s32 1, %s7
  %s10 = scalar_select 0, %s9, %s7
  loop: start=0, step=1, limit=4
  $region2: #{conv_bn_relu.2} parent=0 // loop_pre_header
    _
  $region3: #{conv_bn_relu.2} parent=0 // loop_header
    %s12 = sphi 0, %s16
    %p13 = scmp.ge.s32.totalorder %s12, 4
    %s19 = sphi 0, %s38
    %s20 = sphi 0, %s34
    %s21 = sphi 0, %s30
    %s22 = sphi 0, %s19
    %s23 = sphi 0, %s20
    %s24 = sphi 0, %s21
    %s25 = sphi 0, %s22
    %s26 = sphi 0, %s23
    %s27 = sphi 0, %s24
    %s43 = sphi 0, %s45
    %s46 = sphi 0, %s43
    %s47 = sphi 0, %s46
    %s63 = sphi 0, %s47
    %s71 = sphi 0, %s73
    %s74 = sphi 0, %s71
    %s75 = sphi 0, %s74
    %s91 = sphi 0, %s75
    %s97 = sphi 0, %s99
    %s100 = sphi 0, %s97
    %s101 = sphi 0, %s100
    %s117 = sphi 0, %s101
    %s127 = sphi 0, %s129
    %s130 = sphi 0, %s127
    %s131 = sphi 0, %s130
    %s147 = sphi 0, %s131
    %s157 = sphi 0, %s159
    %s160 = sphi 0, %s157
    %s161 = sphi 0, %s160
    %s177 = sphi 0, %s161
    %s187 = sphi 0, %s189
    %s190 = sphi 0, %s187
    %s191 = sphi 0, %s190
    %s207 = sphi 0, %s191
  $region4: #{conv_bn_relu.2} parent=0 // loop_header_branch
    %15 = sbr.rel (%p13) target = $region8
  $region5: #{conv_bn_relu.2} parent=0 // loop_body
    %s17 = ssub.s32 %s12, 1
    %s18 = ssub.s32 %s12, 2
    %s28 = sadd.s32 1, %s21
    %p29 = scmp.ge.s32.totalorder %s28, 1
    %s30 = scalar_select %p29, 0, %s28
    %s31 = sadd.s32 1, %s20
    %s32 = scalar_select %p29, %s31, %s20
    %p33 = scmp.ge.s32.totalorder %s32, 2
    %s34 = scalar_select %p33, 0, %s32
    %s35 = sadd.s32 1, %s19
    %s36 = scalar_select %p33, %s35, %s19
    %p37 = scmp.ge.s32.totalorder %s36, 1
    %s38 = scalar_select %p37, 0, %s36
    %s39 = ssub.s32 %s20, %s34
    %s40 = ssub.s32 %s21, %s30
    %s41 = sor.u32 %s39, %s40
    %p42 = scmp.eq.s32.totalorder %s41, 0
    %s44 = sadd.s32 %s43, 1
    %s45 = scalar_select %p42, %s43, %s44
    %p48 = pneg %p42
    %p49 = scmp.eq.s32.totalorder %s12, 1
    %p50 = por %p48, %p49
    %p51 = scmp.ne.s32.totalorder %s43, %s46
    %p52 = scmp.eq.s32.totalorder %s12, 0
    %p53 = por %p51, %p52
    %p54 = scmp.ne.s32.totalorder %s43, %s46
    %p55 = scmp.eq.s32.totalorder %s17, 1
    %p56 = por %p54, %p55
    %p57 = scmp.ne.s32.totalorder %s46, %s47
    %p58 = scmp.eq.s32.totalorder %s17, 0
    %p59 = por %p57, %p58
    %p60 = scmp.ne.s32.totalorder %s46, %s47
    %p61 = scmp.eq.s32.totalorder %s18, 1
    %p62 = por %p60, %p61
    %p64 = scmp.ne.s32.totalorder %s47, %s63
    %p65 = scmp.eq.s32.totalorder %s18, 0
    %p66 = por %p64, %p65
    %s67 = ssub.s32 %s20, %s34
    %s68 = ssub.s32 %s21, %s30
    %s69 = sor.u32 %s67, %s68
    %p70 = scmp.eq.s32.totalorder %s69, 0
    %s72 = sadd.s32 %s71, 1
    %s73 = scalar_select %p70, %s71, %s72
    %p76 = pneg %p70
    %p77 = scmp.eq.s32.totalorder %s12, 1
    %p78 = por %p76, %p77
    %p79 = scmp.ne.s32.totalorder %s71, %s74
    %p80 = scmp.eq.s32.totalorder %s12, 0
    %p81 = por %p79, %p80
    %p82 = scmp.ne.s32.totalorder %s71, %s74
    %p83 = scmp.eq.s32.totalorder %s17, 1
    %p84 = por %p82, %p83
    %p85 = scmp.ne.s32.totalorder %s74, %s75
    %p86 = scmp.eq.s32.totalorder %s17, 0
    %p87 = por %p85, %p86
    %p88 = scmp.ne.s32.totalorder %s74, %s75
    %p89 = scmp.eq.s32.totalorder %s18, 1
    %p90 = por %p88, %p89
    %p92 = scmp.ne.s32.totalorder %s75, %s91
    %p93 = scmp.eq.s32.totalorder %s18, 0
    %p94 = por %p92, %p93
    %s95 = ssub.s32 %s19, %s38
    %p96 = scmp.eq.s32.totalorder %s95, 0
    %s98 = sadd.s32 %s97, 1
    %s99 = scalar_select %p96, %s97, %s98
    %p102 = pneg %p96
    %p103 = scmp.eq.s32.totalorder %s12, 1
    %p104 = por %p102, %p103
    %p105 = scmp.ne.s32.totalorder %s97, %s100
    %p106 = scmp.eq.s32.totalorder %s12, 0
    %p107 = por %p105, %p106
    %p108 = scmp.ne.s32.totalorder %s97, %s100
    %p109 = scmp.eq.s32.totalorder %s17, 1
    %p110 = por %p108, %p109
    %p111 = scmp.ne.s32.totalorder %s100, %s101
    %p112 = scmp.eq.s32.totalorder %s17, 0
    %p113 = por %p111, %p112
    %p114 = scmp.ne.s32.totalorder %s100, %s101
    %p115 = scmp.eq.s32.totalorder %s18, 1
    %p116 = por %p114, %p115
    %p118 = scmp.ne.s32.totalorder %s101, %s117
    %p119 = scmp.eq.s32.totalorder %s18, 0
    %p120 = por %p118, %p119
    %s121 = ssub.s32 %s20, %s34
    %s122 = ssub.s32 %s19, %s38
    %s123 = sor.u32 %s121, %s122
    %s124 = ssub.s32 %s21, %s30
    %s125 = sor.u32 %s123, %s124
    %p126 = scmp.eq.s32.totalorder %s125, 0
    %s128 = sadd.s32 %s127, 1
    %s129 = scalar_select %p126, %s127, %s128
    %p132 = pneg %p126
    %p133 = scmp.eq.s32.totalorder %s12, 1
    %p134 = por %p132, %p133
    %p135 = scmp.ne.s32.totalorder %s127, %s130
    %p136 = scmp.eq.s32.totalorder %s12, 0
    %p137 = por %p135, %p136
    %p138 = scmp.ne.s32.totalorder %s127, %s130
    %p139 = scmp.eq.s32.totalorder %s17, 1
    %p140 = por %p138, %p139
    %p141 = scmp.ne.s32.totalorder %s130, %s131
    %p142 = scmp.eq.s32.totalorder %s17, 0
    %p143 = por %p141, %p142
    %p144 = scmp.ne.s32.totalorder %s130, %s131
    %p145 = scmp.eq.s32.totalorder %s18, 1
    %p146 = por %p144, %p145
    %p148 = scmp.ne.s32.totalorder %s131, %s147
    %p149 = scmp.eq.s32.totalorder %s18, 0
    %p150 = por %p148, %p149
    %s151 = ssub.s32 %s20, %s34
    %s152 = ssub.s32 %s21, %s30
    %s153 = sor.u32 %s151, %s152
    %s154 = ssub.s32 %s19, %s38
    %s155 = sor.u32 %s153, %s154
    %p156 = scmp.eq.s32.totalorder %s155, 0
    %s158 = sadd.s32 %s157, 1
    %s159 = scalar_select %p156, %s157, %s158
    %p162 = pneg %p156
    %p163 = scmp.eq.s32.totalorder %s12, 1
    %p164 = por %p162, %p163
    %p165 = scmp.ne.s32.totalorder %s157, %s160
    %p166 = scmp.eq.s32.totalorder %s12, 0
    %p167 = por %p165, %p166
    %p168 = scmp.ne.s32.totalorder %s157, %s160
    %p169 = scmp.eq.s32.totalorder %s17, 1
    %p170 = por %p168, %p169
    %p171 = scmp.ne.s32.totalorder %s160, %s161
    %p172 = scmp.eq.s32.totalorder %s17, 0
    %p173 = por %p171, %p172
    %p174 = scmp.ne.s32.totalorder %s160, %s161
    %p175 = scmp.eq.s32.totalorder %s18, 1
    %p176 = por %p174, %p175
    %p178 = scmp.ne.s32.totalorder %s161, %s177
    %p179 = scmp.eq.s32.totalorder %s18, 0
    %p180 = por %p178, %p179
    %s181 = ssub.s32 %s20, %s34
    %s182 = ssub.s32 %s21, %s30
    %s183 = sor.u32 %s181, %s182
    %s184 = ssub.s32 %s19, %s38
    %s185 = sor.u32 %s183, %s184
    %p186 = scmp.eq.s32.totalorder %s185, 0
    %s188 = sadd.s32 %s187, 1
    %s189 = scalar_select %p186, %s187, %s188
    %p192 = pneg %p186
    %p193 = scmp.eq.s32.totalorder %s12, 1
    %p194 = por %p192, %p193
    %p195 = scmp.ne.s32.totalorder %s187, %s190
    %p196 = scmp.eq.s32.totalorder %s12, 0
    %p197 = por %p195, %p196
    %p198 = scmp.ne.s32.totalorder %s187, %s190
    %p199 = scmp.eq.s32.totalorder %s17, 1
    %p200 = por %p198, %p199
    %p201 = scmp.ne.s32.totalorder %s190, %s191
    %p202 = scmp.eq.s32.totalorder %s17, 0
    %p203 = por %p201, %p202
    %p204 = scmp.ne.s32.totalorder %s190, %s191
    %p205 = scmp.eq.s32.totalorder %s18, 1
    %p206 = por %p204, %p205
    %p208 = scmp.ne.s32.totalorder %s191, %s207
    %p209 = scmp.eq.s32.totalorder %s18, 0
    %p210 = por %p208, %p209
    %p211 = scmp.le.s32.totalorder 1, %s12
    %p212 = scmp.lt.s32.totalorder %s12, 3
    %p213 = pnand %p211, %p212
    %p214 = pneg %p213
    // Predicated region
    $region9: #{conv_bn_relu.2} parent=5 // pred_check
      _
    $region10: #{conv_bn_relu.2} parent=5 // pred_check_branch
      %216 = sbr.rel (%p213) target = $region12
    $region11: #{conv_bn_relu.2} parent=5 // pred_region
      %s217 = ssub.s32 %s12, 1
      // Predicated region
      $region13: #{conv_bn_relu.2} parent=11 // pred_check
        %p218 = pneg %p113
      $region14: #{conv_bn_relu.2} parent=11 // pred_check_branch
        %220 = sbr.rel (%p218) target = $region16
      $region15: #{conv_bn_relu.2} parent=11 // pred_region
        %p221 = scmp.lt.s32.totalorder %s22, 0
        %s222 = scalar_select %p221, %s22, 0
        %s223 = smul.addr %s222, 8
        %s224 = scalar_lea.vmem %s2, %s223
      $region16: #{conv_bn_relu.2} parent=11 // pred_fallthru
        _
    $region12: #{conv_bn_relu.2} parent=5 // pred_fallthru
      _
    %p225 = scmp.lt.s32.totalorder %s12, 2
    // Predicated region
    $region17: #{conv_bn_relu.2} parent=5 // pred_check
      %p226 = pneg %p225
    $region18: #{conv_bn_relu.2} parent=5 // pred_check_branch
      %228 = sbr.rel (%p226) target = $region20
    $region19: #{conv_bn_relu.2} parent=5 // pred_region
      // Predicated region
      $region21: #{conv_bn_relu.2} parent=19 // pred_check
        %p229 = pneg %p53
      $region22: #{conv_bn_relu.2} parent=19 // pred_check_branch
        %231 = sbr.rel (%p229) target = $region24
      $region23: #{conv_bn_relu.2} parent=19 // pred_region
        %p232 = scmp.lt.s32.totalorder %s20, 1
        %s233 = scalar_select %p232, %s20, 1
        %p234 = scmp.lt.s32.totalorder %s21, 1
        %s235 = scalar_select %p234, %s21, 1
        %s236 = smul.addr %s233, 2
        %s237 = sadd.s32 %s235, %s236
        %s238 = smul.addr %s237, 8
        %s239 = scalar_lea.vmem %s0, %s238
      $region24: #{conv_bn_relu.2} parent=19 // pred_fallthru
        _
      // Predicated region
      $region25: #{conv_bn_relu.2} parent=19 // pred_check
        %p240 = pneg %p81
      $region26: #{conv_bn_relu.2} parent=19 // pred_check_branch
        %242 = sbr.rel (%p240) target = $region28
      $region27: #{conv_bn_relu.2} parent=19 // pred_region
        %p243 = scmp.lt.s32.totalorder %s20, 1
        %s244 = scalar_select %p243, %s20, 1
        %p245 = scmp.lt.s32.totalorder %s21, 0
        %s246 = scalar_select %p245, %s21, 0
        %s247 = sadd.s32 %s246, %s244
        %s248 = smul.addr %s247, 8
        %s249 = scalar_lea.vmem %s1, %s248
      $region28: #{conv_bn_relu.2} parent=19 // pred_fallthru
        _
    $region20: #{conv_bn_relu.2} parent=5 // pred_fallthru
      _
    %p250 = scmp.le.s32.totalorder 1, %s12
    %p251 = scmp.lt.s32.totalorder %s12, 3
    %p252 = pnand %p250, %p251
    %p253 = pneg %p252
    // Predicated region
    $region29: #{conv_bn_relu.2} parent=5 // pred_check
      _
    $region30: #{conv_bn_relu.2} parent=5 // pred_check_branch
      %255 = sbr.rel (%p252) target = $region32
    $region31: #{conv_bn_relu.2} parent=5 // pred_region
      %s256 = ssub.s32 %s12, 1
      %p257 = scmp.lt.s32.totalorder %s23, 1
      %s258 = scalar_select %p257, %s23, 1
      %p259 = scmp.lt.s32.totalorder %s24, 1
      %s260 = scalar_select %p259, %s24, 1
      %s261 = smul.addr %s258, 2
      %s262 = sadd.s32 %s260, %s261
      %s263 = smul.addr %s262, 8
      %s264 = scalar_lea.vmem %s0, %s263
      %p265 = pneg %p59
      %p266 = pneg %p56
      %p267 = scmp.lt.s32.totalorder %s23, 1
      %s268 = scalar_select %p267, %s23, 1
      %p269 = scmp.lt.s32.totalorder %s24, 0
      %s270 = scalar_select %p269, %s24, 0
      %s271 = sadd.s32 %s270, %s268
      %s272 = smul.addr %s271, 8
      %s273 = scalar_lea.vmem %s1, %s272
      %p274 = pneg %p87
      %p275 = pneg %p84
      %p276 = scmp.lt.s32.totalorder %s22, 0
      %s277 = scalar_select %p276, %s22, 0
      %s278 = smul.addr %s277, 8
      %s279 = scalar_lea.vmem %s2, %s278
      %p280 = pneg %p113
      %p281 = pneg %p110
      %p282 = pneg %p143
      %p283 = pneg %p140
      %p284 = scmp.lt.s32.totalorder %s23, 1
      %s285 = scalar_select %p284, %s23, 1
      %p286 = scmp.lt.s32.totalorder %s22, 0
      %s287 = scalar_select %p286, %s22, 0
      %p288 = scmp.lt.s32.totalorder %s24, 0
      %s289 = scalar_select %p288, %s24, 0
      %s290 = sadd.s32 %s289, %s287
      %s291 = sadd.s32 %s290, %s285
      %s292 = smul.addr %s291, 8
      %s293 = scalar_lea.vmem %s3, %s292
      %p294 = pneg %p173
      %p295 = pneg %p170
      %p296 = scmp.lt.s32.totalorder %s23, 1
      %s297 = scalar_select %p296, %s23, 1
      %p298 = scmp.lt.s32.totalorder %s24, 0
      %s299 = scalar_select %p298, %s24, 0
      %p300 = scmp.lt.s32.totalorder %s22, 0
      %s301 = scalar_select %p300, %s22, 0
      %s302 = sadd.s32 %s301, %s299
      %s303 = sadd.s32 %s302, %s297
      %s304 = smul.addr %s303, 8
      %s305 = scalar_lea.vmem %s4, %s304
      %p306 = pneg %p203
      %p307 = pneg %p200
      %p308 = scmp.lt.s32.totalorder %s23, 1
      %s309 = scalar_select %p308, %s23, 1
      %p310 = scmp.lt.s32.totalorder %s24, 0
      %s311 = scalar_select %p310, %s24, 0
      %p312 = scmp.lt.s32.totalorder %s22, 0
      %s313 = scalar_select %p312, %s22, 0
      %s314 = sadd.s32 %s313, %s311
      %s315 = sadd.s32 %s314, %s309
      %s316 = smul.addr %s315, 8
      %s317 = scalar_lea.vmem %s5, %s316
      %p318 = scmp.lt.s32.totalorder %s23, 1
      %s319 = scalar_select %p318, %s23, 1
      %p320 = scmp.lt.s32.totalorder %s24, 1
      %s321 = scalar_select %p320, %s24, 1
      %s322 = smul.addr %s319, 2
      %s323 = sadd.s32 %s321, %s322
      %s324 = smul.addr %s323, 8
      %s325 = scalar_lea.vmem %s0, %s324
      %p326 = scmp.lt.s32.totalorder %s23, 1
      %s327 = scalar_select %p326, %s23, 1
      %p328 = scmp.lt.s32.totalorder %s24, 0
      %s329 = scalar_select %p328, %s24, 0
      %s330 = sadd.s32 %s329, %s327
      %s331 = smul.addr %s330, 8
      %s332 = scalar_lea.vmem %s1, %s331
      %p333 = scmp.lt.s32.totalorder %s22, 0
      %s334 = scalar_select %p333, %s22, 0
      %s335 = smul.addr %s334, 8
      %s336 = scalar_lea.vmem %s2, %s335
      %p337 = scmp.lt.s32.totalorder %s23, 1
      %s338 = scalar_select %p337, %s23, 1
      %p339 = scmp.lt.s32.totalorder %s22, 0
      %s340 = scalar_select %p339, %s22, 0
      %p341 = scmp.lt.s32.totalorder %s24, 0
      %s342 = scalar_select %p341, %s24, 0
      %s343 = sadd.s32 %s342, %s340
      %s344 = sadd.s32 %s343, %s338
      %s345 = smul.addr %s344, 8
      %s346 = scalar_lea.vmem %s3, %s345
      %p347 = scmp.lt.s32.totalorder %s23, 1
      %s348 = scalar_select %p347, %s23, 1
      %p349 = scmp.lt.s32.totalorder %s24, 0
      %s350 = scalar_select %p349, %s24, 0
      %p351 = scmp.lt.s32.totalorder %s22, 0
      %s352 = scalar_select %p351, %s22, 0
      %s353 = sadd.s32 %s352, %s350
      %s354 = sadd.s32 %s353, %s348
      %s355 = smul.addr %s354, 8
      %s356 = scalar_lea.vmem %s4, %s355
      %p357 = scmp.lt.s32.totalorder %s23, 1
      %s358 = scalar_select %p357, %s23, 1
      %p359 = scmp.lt.s32.totalorder %s24, 0
      %s360 = scalar_select %p359, %s24, 0
      %p361 = scmp.lt.s32.totalorder %s22, 0
      %s362 = scalar_select %p361, %s22, 0
      %s363 = sadd.s32 %s362, %s360
      %s364 = sadd.s32 %s363, %s358
      %s365 = smul.addr %s364, 8
      %s366 = scalar_lea.vmem %s5, %s365
      %v367 = vld [vmem:[%s325] sm:$0xff]
      %v368 = vld [vmem:[%s332] sm:$0xff]
      %371 = vrot.lane.b32.xlu0 %v367, 127
      %v372 = vpop.permute.xlu0 %371
      %373 = vrot.lane.b32.xlu0 %v368, 127
      %v374 = vpop.permute.xlu0 %373
      %vm375 = vcmask 1039360
      %v376 = vsel %vm375, %v372, %v374
      %378 = vrot.lane.b32.xlu0 %v367, 126
      %v379 = vpop.permute.xlu0 %378
      %380 = vrot.lane.b32.xlu0 %v368, 126
      %v381 = vpop.permute.xlu0 %380
      %vm382 = vcmask 1031168
      %v383 = vsel %vm382, %v379, %v381
      %v385 = vld [vmem:[%s336] sm:$0xff]
      %vm386 = vcmask 195584
      %v388 = vsel %vm386, %v385, 0
      %390 = vmatprep.subr.mxu0 0.0
      %391 = vmatpush1.msra.mxu0 0.0
      %392 = vmatprep.subr.mxu0 0.0
      %393 = vmatpush1.msra.mxu0 0.0
      %394 = vmatprep.subr.mxu0 0.0
      %395 = vmatpush1.msra.mxu0 0.0
      %396 = vmatprep.subr.mxu0 0.0
      %397 = vmatpush1.msra.mxu0 0.0
      %398 = vmatprep.subr.mxu0 0.0
      %399 = vmatpush1.msra.mxu0 0.0
      %400 = vmatprep.subr.mxu0 0.0
      %401 = vmatpush1.msra.mxu0 0.0
      %402 = vmatprep.subr.mxu0 0.0
      %403 = vmatpush1.msra.mxu0 0.0
      %404 = vmatprep.subr.mxu0 0.0
      %405 = vmatpush1.msra.mxu0 0.0
      %406 = vmatprep.subr.mxu0 0.0
      %407 = vmatpush1.msra.mxu0 0.0
      %408 = vmatprep.subr.mxu0 0.0
      %409 = vmatpush1.msra.mxu0 0.0
      %410 = vmatprep.subr.mxu0 0.0
      %411 = vmatpush1.msra.mxu0 0.0
      %412 = vmatprep.subr.mxu0 0.0
      %413 = vmatpush1.msra.mxu0 0.0
      %414 = vmatprep.subr.mxu0 0.0
      %415 = vmatpush1.msra.mxu0 0.0
      %416 = vmatprep.subr.mxu0 0.0
      %417 = vmatpush1.msra.mxu0 %v383
      %418 = vmatprep.subr.mxu0 0.0
      %419 = vmatpush1.msra.mxu0 %v376
      %420 = vmatprep.subr.mxu0 0.0
      %421 = vmatpush1.msra.mxu0 %v367
      %422 = vmatprep.subr.mxu0 0.0
      %423 = vmatpush2.msra.mxu0 0.0
      %424 = vmatprep.subr.mxu0 0.0
      %425 = vmatpush2.msra.mxu0 0.0
      %426 = vmatprep.subr.mxu0 0.0
      %427 = vmatpush2.msra.mxu0 0.0
      %428 = vmatprep.subr.mxu0 0.0
      %429 = vmatpush2.msra.mxu0 0.0
      %430 = vmatprep.subr.mxu0 0.0
      %431 = vmatpush2.msra.mxu0 0.0
      %432 = vmatprep.subr.mxu0 0.0
      %433 = vmatpush2.msra.mxu0 0.0
      %434 = vmatprep.subr.mxu0 0.0
      %435 = vmatpush2.msra.mxu0 0.0
      %436 = vmatprep.subr.mxu0 0.0
      %437 = vmatpush2.msra.mxu0 0.0
      %438 = vmatprep.subr.mxu0 0.0
      %439 = vmatpush2.msra.mxu0 0.0
      %440 = vmatprep.subr.mxu0 0.0
      %441 = vmatpush2.msra.mxu0 0.0
      %442 = vmatprep.subr.mxu0 0.0
      %443 = vmatpush2.msra.mxu0 0.0
      %444 = vmatprep.subr.mxu0 0.0
      %445 = vmatpush2.msra.mxu0 0.0
      %446 = vmatprep.subr.mxu0 0.0
      %447 = vmatpush2.msra.mxu0 0.0
      %448 = vmatprep.subr.mxu0 0.0
      %449 = vmatpush2.msra.mxu0 0.0
      %450 = vmatprep.subr.mxu0 0.0
      %451 = vmatpush2.msra.mxu0 0.0
      %452 = vmatprep.subr.mxu0 0.0
      %453 = vmatpush2.msra.mxu0 0.0
      %454 = vmatprep.mubr.f32.mxu0 0.0
      %455 = vmatmul.mubr.f32.gmra.mxu0 %v388
      %v456 = vpop.f32.mrf.mxu0
      %v457 = vadd.f32 0.0, %v456
      %v458 = vpop.f32.mrf.mxu0
      %459 = vdwg.mxu0
      %460 = vst [vmem:[%s346] sm:$0xff] %v457
      %v461 = vlaneseq
      %v462 = vand.u32 %v461, 127
      %s463 = smul.u32 %s24, 128
      %v464 = vstv %s463
      %v465 = vadd.s32 %v462, %v464
      %vm466 = vcmp.lt.s32.totalorder %v465, 16
      %v467 = vsel %vm466, 1, 0
      %vm468 = vcmp.eq.s32.totalorder %v467, 1
      %v469 = vsel %vm468, %v457, 0.0
      %v470 = vadd.f32 %v469, 0.0
      %v471 = vmul.f32 %v469, %v469
      %v472 = vadd.f32 %v471, 0.0
      %473 = vst [vmem:[%s356] sm:$0xff] %v470
      %474 = vst [vmem:[%s366] sm:$0xff] %v472
      %p475 = scmp.lt.s32.totalorder %s23, 1
      %s476 = scalar_select %p475, %s23, 1
      %p477 = scmp.lt.s32.totalorder %s22, 0
      %s478 = scalar_select %p477, %s22, 0
      %p479 = scmp.lt.s32.totalorder %s24, 0
      %s480 = scalar_select %p479, %s24, 0
      %s481 = sadd.s32 %s480, %s478
      %s482 = sadd.s32 %s481, %s476
      %s483 = smul.addr %s482, 8
      %s484 = scalar_lea.vmem %s3, %s483
      %p485 = scmp.lt.s32.totalorder %s23, 1
      %s486 = scalar_select %p485, %s23, 1
      %p487 = scmp.lt.s32.totalorder %s24, 0
      %s488 = scalar_select %p487, %s24, 0
      %p489 = scmp.lt.s32.totalorder %s22, 0
      %s490 = scalar_select %p489, %s22, 0
      %s491 = sadd.s32 %s490, %s488
      %s492 = sadd.s32 %s491, %s486
      %s493 = smul.addr %s492, 8
      %s494 = scalar_lea.vmem %s4, %s493
      %p495 = scmp.lt.s32.totalorder %s23, 1
      %s496 = scalar_select %p495, %s23, 1
      %p497 = scmp.lt.s32.totalorder %s24, 0
      %s498 = scalar_select %p497, %s24, 0
      %p499 = scmp.lt.s32.totalorder %s22, 0
      %s500 = scalar_select %p499, %s22, 0
      %s501 = sadd.s32 %s500, %s498
      %s502 = sadd.s32 %s501, %s496
      %s503 = smul.addr %s502, 8
      %s504 = scalar_lea.vmem %s5, %s503
      // Predicated region
      $region33: #{conv_bn_relu.2} parent=31 // pred_check
        %p505 = pneg %p140
      $region34: #{conv_bn_relu.2} parent=31 // pred_check_branch
        %507 = sbr.rel (%p505) target = $region36
      $region35: #{conv_bn_relu.2} parent=31 // pred_region
        _
      $region36: #{conv_bn_relu.2} parent=31 // pred_fallthru
        _
      // Predicated region
      $region37: #{conv_bn_relu.2} parent=31 // pred_check
        %p508 = pneg %p170
      $region38: #{conv_bn_relu.2} parent=31 // pred_check_branch
        %510 = sbr.rel (%p508) target = $region40
      $region39: #{conv_bn_relu.2} parent=31 // pred_region
        _
      $region40: #{conv_bn_relu.2} parent=31 // pred_fallthru
        _
      // Predicated region
      $region41: #{conv_bn_relu.2} parent=31 // pred_check
        %p511 = pneg %p200
      $region42: #{conv_bn_relu.2} parent=31 // pred_check_branch
        %513 = sbr.rel (%p511) target = $region44
      $region43: #{conv_bn_relu.2} parent=31 // pred_region
        _
      $region44: #{conv_bn_relu.2} parent=31 // pred_fallthru
        _
    $region32: #{conv_bn_relu.2} parent=5 // pred_fallthru
      _
    %p514 = scmp.le.s32.totalorder 2, %s12
    // Predicated region
    $region45: #{conv_bn_relu.2} parent=5 // pred_check
      %p515 = pneg %p514
    $region46: #{conv_bn_relu.2} parent=5 // pred_check_branch
      %517 = sbr.rel (%p515) target = $region48
    $region47: #{conv_bn_relu.2} parent=5 // pred_region
      %s518 = ssub.s32 %s12, 2
      // Predicated region
      $region49: #{conv_bn_relu.2} parent=47 // pred_check
        %p519 = pneg %p146
      $region50: #{conv_bn_relu.2} parent=47 // pred_check_branch
        %521 = sbr.rel (%p519) target = $region52
      $region51: #{conv_bn_relu.2} parent=47 // pred_region
        %p522 = scmp.lt.s32.totalorder %s26, 1
        %s523 = scalar_select %p522, %s26, 1
        %p524 = scmp.lt.s32.totalorder %s25, 0
        %s525 = scalar_select %p524, %s25, 0
        %p526 = scmp.lt.s32.totalorder %s27, 0
        %s527 = scalar_select %p526, %s27, 0
        %s528 = sadd.s32 %s527, %s525
        %s529 = sadd.s32 %s528, %s523
        %s530 = smul.addr %s529, 8
        %s531 = scalar_lea.vmem %s3, %s530
      $region52: #{conv_bn_relu.2} parent=47 // pred_fallthru
        _
      // Predicated region
      $region53: #{conv_bn_relu.2} parent=47 // pred_check
        %p532 = pneg %p176
      $region54: #{conv_bn_relu.2} parent=47 // pred_check_branch
        %534 = sbr.rel (%p532) target = $region56
      $region55: #{conv_bn_relu.2} parent=47 // pred_region
        %p535 = scmp.lt.s32.totalorder %s26, 1
        %s536 = scalar_select %p535, %s26, 1
        %p537 = scmp.lt.s32.totalorder %s27, 0
        %s538 = scalar_select %p537, %s27, 0
        %p539 = scmp.lt.s32.totalorder %s25, 0
        %s540 = scalar_select %p539, %s25, 0
        %s541 = sadd.s32 %s540, %s538
        %s542 = sadd.s32 %s541, %s536
        %s543 = smul.addr %s542, 8
        %s544 = scalar_lea.vmem %s4, %s543
      $region56: #{conv_bn_relu.2} parent=47 // pred_fallthru
        _
      // Predicated region
      $region57: #{conv_bn_relu.2} parent=47 // pred_check
        %p545 = pneg %p206
      $region58: #{conv_bn_relu.2} parent=47 // pred_check_branch
        %547 = sbr.rel (%p545) target = $region60
      $region59: #{conv_bn_relu.2} parent=47 // pred_region
        %p548 = scmp.lt.s32.totalorder %s26, 1
        %s549 = scalar_select %p548, %s26, 1
        %p550 = scmp.lt.s32.totalorder %s27, 0
        %s551 = scalar_select %p550, %s27, 0
        %p552 = scmp.lt.s32.totalorder %s25, 0
        %s553 = scalar_select %p552, %s25, 0
        %s554 = sadd.s32 %s553, %s551
        %s555 = sadd.s32 %s554, %s549
        %s556 = smul.addr %s555, 8
        %s557 = scalar_lea.vmem %s5, %s556
      $region60: #{conv_bn_relu.2} parent=47 // pred_fallthru
        _
    $region48: #{conv_bn_relu.2} parent=5 // pred_fallthru
      _
  $region6: #{conv_bn_relu.2} parent=0 // loop_footer
    %s16 = sadd.s32 1, %s12
  $region7: #{conv_bn_relu.2} parent=0 // loop_footer_branch
    %11 = sbr.rel target = $region3
  $region8: #{conv_bn_relu.2} parent=0 // loop_exit
    _

</llo_original>
